<compile_context>
chip_gen: v7x
topology: tpu7x:2x2x1
jax: 0.10.0
libtpu: 0.0.40
codegen_flags: <defaults>
</compile_context>

<pallas_src>
import functools

import jax
import jax.numpy as jnp
import numpy as np
from jax.experimental import pallas as pl
from jax.experimental.pallas import tpu as pltpu

H = 20          # hidden width: nn.Linear(1, 20), (20, 20), (20, 1)
P_COLS = 32     # packed-parameter columns (>= H + 5)


def mlp_kernel(x_ref, p_ref, o_ref):
    # x_ref: [1, N]      (batch on the lane axis)
    # p_ref: [H, P_COLS] packed parameters:
    #   cols 0..H-1 : w2            [H, H]
    #   col  H      : w1[:, 0]      [H]
    #   col  H+1    : b1[:, 0]      [H]
    #   col  H+2    : b2[:, 0]      [H]
    #   col  H+3    : w3[0, :]      [H]   (fc3 weight, transposed to a column)
    #   col  H+4    : b3 (broadcast)
    x = x_ref[...]                                   # [1, N]
    p = p_ref[...]                                   # [H, P_COLS]

    w2 = p[:, 0:H]                                   # [H, H]
    w1 = p[:, H:H + 1]                               # [H, 1]
    b1 = p[:, H + 1:H + 2]                           # [H, 1]
    b2 = p[:, H + 2:H + 3]                           # [H, 1]
    w3c = p[:, H + 3:H + 4]                          # [H, 1]
    b3 = p[0:1, H + 4:H + 5]                         # [1, 1]

    # fc1 (+ReLU): contraction length 1 -> VPU broadcast multiply, no MXU.
    h1 = jnp.maximum(w1 * x + b1, 0.0)               # [H, N]

    # fc2 (+ReLU): one MXU pass over the full [H, H] x [H, N] contraction.
    h2 = jnp.dot(w2, h1, preferred_element_type=jnp.float32) + b2
    h2 = jnp.maximum(h2, 0.0)                        # [H, N]

    # fc3 (no activation): M == 1 -> VPU multiply + cross-sublane reduce (XLU),
    # skipping a second MXU push/drain.
    y = jnp.sum(w3c * h2, axis=0, keepdims=True) + b3    # [1, N]
    o_ref[...] = y.astype(o_ref.dtype)


@jax.jit
def net_forward(x, packed):
    """x: [N, 1] float32 (PyTorch layout). packed: [H, P_COLS]. Returns [N, 1]."""
    n = x.shape[0]
    x_t = x.reshape(1, n)                            # batch -> lane axis

    vmem = pl.BlockSpec(memory_space=pltpu.MemorySpace.VMEM)
    y_t = pl.pallas_call(
        mlp_kernel,
        out_shape=jax.ShapeDtypeStruct((1, n), jnp.float32),
        in_specs=[vmem, vmem],        # 2 full-array DMAs total
        out_specs=vmem,
    )(x_t, packed)

    return y_t.reshape(n, 1)


def init_params(key):
    """Deterministic init mimicking PyTorch's default U(-1/sqrt(fan_in), +).

    Weights in PyTorch-native [out, in] layout; biases as [out, 1] columns.
    """
    ks = jax.random.split(key, 6)

    def lin(kw, kb, fan_in, fan_out):
        bound = 1.0 / np.sqrt(fan_in)
        w = jax.random.uniform(kw, (fan_out, fan_in), jnp.float32, -bound, bound)
        b = jax.random.uniform(kb, (fan_out, 1), jnp.float32, -bound, bound)
        return w, b

    w1, b1 = lin(ks[0], ks[1], 1, H)
    w2, b2 = lin(ks[2], ks[3], H, H)
    w3, b3 = lin(ks[4], ks[5], H, 1)
    return (w1, b1, w2, b2, w3, b3)


def pack_params(params):
    """Pack all six parameter tensors into a single [H, P_COLS] f32 array."""
    w1, b1, w2, b2, w3, b3 = params
    packed = jnp.zeros((H, P_COLS), jnp.float32)
    packed = packed.at[:, 0:H].set(w2)
    packed = packed.at[:, H].set(w1[:, 0])
    packed = packed.at[:, H + 1].set(b1[:, 0])
    packed = packed.at[:, H + 2].set(b2[:, 0])
    packed = packed.at[:, H + 3].set(w3[0, :])
    packed = packed.at[:, H + 4].set(jnp.full((H,), b3[0, 0], jnp.float32))
    return packed


def reference_forward(x, params):
    """Pure-JAX reference identical to the PyTorch forward (x @ W.T + b)."""
    w1, b1, w2, b2, w3, b3 = params
    h1 = jnp.maximum(x @ w1.T + b1.T, 0.0)
    h2 = jnp.maximum(h1 @ w2.T + b2.T, 0.0)
    return h2 @ w3.T + b3.T


if __name__ == "__main__":
    key = jax.random.PRNGKey(0)
    params = init_params(key)
    packed = pack_params(params)

    # x = unsqueeze(linspace(-pi, pi, 200), dim=1)  ->  shape (200, 1)
    x = jnp.linspace(-np.pi, np.pi, 200, dtype=jnp.float32).reshape(-1, 1)

    out = net_forward(x, packed)
    out = jax.block_until_ready(out)

    ref = reference_forward(x, params)
    assert out.shape == (200, 1)
    np.testing.assert_allclose(np.asarray(out), np.asarray(ref),
                               rtol=1e-5, atol=1e-5)
    print("KERNEL_OK")
</pallas_src>

<mosaic_0001>
module attributes {stable_mosaic.version = 11 : i64} {
  func.func @mlp_kernel(%arg0: memref<1x200xf32, #tpu.memory_space<vmem>>, %arg1: memref<20x32xf32, #tpu.memory_space<vmem>>, %arg2: memref<1x200xf32, #tpu.memory_space<vmem>>) attributes {dimension_semantics = [], scalar_prefetch = 0 : i64, scratch_operands = 0 : i64, tpu.core_type = #tpu.core_type<tc>} {
    %c0 = arith.constant 0 : index
    %c0_0 = arith.constant 0 : index
    %0 = vector.load %arg0[%c0, %c0_0] : memref<1x200xf32, #tpu.memory_space<vmem>>, vector<1x200xf32>
    %c0_1 = arith.constant 0 : index
    %c0_2 = arith.constant 0 : index
    %1 = vector.load %arg1[%c0_1, %c0_2] : memref<20x32xf32, #tpu.memory_space<vmem>>, vector<20x32xf32>
    %2 = vector.extract_strided_slice %1 {offsets = [0, 0], sizes = [20, 20], strides = [1, 1]} : vector<20x32xf32> to vector<20x20xf32>
    %3 = vector.extract_strided_slice %1 {offsets = [0, 20], sizes = [20, 1], strides = [1, 1]} : vector<20x32xf32> to vector<20x1xf32>
    %4 = vector.extract_strided_slice %1 {offsets = [0, 21], sizes = [20, 1], strides = [1, 1]} : vector<20x32xf32> to vector<20x1xf32>
    %5 = vector.extract_strided_slice %1 {offsets = [0, 22], sizes = [20, 1], strides = [1, 1]} : vector<20x32xf32> to vector<20x1xf32>
    %6 = vector.extract_strided_slice %1 {offsets = [0, 23], sizes = [20, 1], strides = [1, 1]} : vector<20x32xf32> to vector<20x1xf32>
    %7 = vector.extract_strided_slice %1 {offsets = [0, 24], sizes = [1, 1], strides = [1, 1]} : vector<20x32xf32> to vector<1x1xf32>
    %8 = vector.broadcast %3 : vector<20x1xf32> to vector<20x200xf32>
    %9 = vector.broadcast %0 : vector<1x200xf32> to vector<20x200xf32>
    %10 = arith.mulf %8, %9 : vector<20x200xf32>
    %11 = vector.broadcast %4 : vector<20x1xf32> to vector<20x200xf32>
    %12 = arith.addf %10, %11 : vector<20x200xf32>
    %cst = arith.constant 0.000000e+00 : f32
    %13 = vector.broadcast %cst : f32 to vector<20x200xf32>
    %14 = arith.maximumf %12, %13 : vector<20x200xf32>
    %cst_3 = arith.constant dense<0.000000e+00> : vector<20x200xf32>
    %15 = tpu.matmul %2, %14, %cst_3 {dimension_numbers = #tpu.dot_dimension_numbers<[1], [0], [0], [1], [0, 0, 1, 1], [], []>} : vector<20x20xf32>, vector<20x200xf32>, vector<20x200xf32> -> vector<20x200xf32>
    %16 = vector.broadcast %5 : vector<20x1xf32> to vector<20x200xf32>
    %17 = arith.addf %15, %16 : vector<20x200xf32>
    %cst_4 = arith.constant 0.000000e+00 : f32
    %18 = vector.broadcast %cst_4 : f32 to vector<20x200xf32>
    %19 = arith.maximumf %17, %18 : vector<20x200xf32>
    %20 = vector.broadcast %6 : vector<20x1xf32> to vector<20x200xf32>
    %21 = arith.mulf %20, %19 : vector<20x200xf32>
    %cst_5 = arith.constant dense<0.000000e+00> : vector<200xf32>
    %22 = vector.multi_reduction <add>, %21, %cst_5 [0] : vector<20x200xf32> to vector<200xf32>
    %23 = vector.shape_cast %22 : vector<200xf32> to vector<1x200xf32>
    %24 = vector.broadcast %7 : vector<1x1xf32> to vector<1x200xf32>
    %25 = arith.addf %23, %24 : vector<1x200xf32>
    %c0_6 = arith.constant 0 : index
    %c0_7 = arith.constant 0 : index
    %26 = vector.load %arg2[%c0_6, %c0_7] : memref<1x200xf32, #tpu.memory_space<vmem>>, vector<1x200xf32>
    tpu.vector_store %arg2[%c0_6, %c0_7], %25 {strides = array<i32>} : memref<1x200xf32, #tpu.memory_space<vmem>>, vector<1x200xf32>,
    return
  }
}

</mosaic_0001>

<llo_original>
// kernel: net_forward.1
$region0: #{net_forward.1}
  #allocation0 [shape = 'u32[]', space=smem, size = 0x4, offset = 0x4, fixed_abs, tag = 'smem constant byte address 0x4 - core index']
  #allocation1 [shape = 'u32[144,128]{1,0:T(1,128)}', space=vmem, size = 0x12000, scoped, tag = 'internal scratch']
  %s0 = inlined_call_operand.vmem [shape: f32[1,200], index: 0, kind: input, shape index: {}]
  %s1 = inlined_call_operand.hbm [shape: f32[20,32], index: 1, kind: input, shape index: {}]
  %s2 = inlined_call_operand.hbm [shape: f32[1,200], index: 2, kind: output, shape index: {}]
  %s3 = sld [smem:[#allocation0]]
  $region22: #{net_forward.1} parent=0
    _
  %s5 = ssub.s32 1, %s3
  %s6 = scalar_select 0, %s5, %s3
  $region1: #{net_forward.1} parent=0
    #allocation2 [shape = 'u8[12288]{0}', space=vmem, size = 0x3000, scoped, tag = 'input window, operand 1, single buffered']
    #allocation3 [shape = 's32[1]{0}', space=sflag, size = 0x4, scoped, tag = 'scoped memory for net_forward.1']
    #allocation4 [shape = 's32[1]{0}', space=sflag, size = 0x4, scoped, tag = 'scoped memory for net_forward.1']
    #allocation5 [shape = 'u8[1024]{0}', space=vmem, size = 0x400, scoped, tag = 'output window, operand 0, single buffered']
    %7 = vsyncpa [#allocation3], 0
    %8 = vsyncpa [#allocation4], 0
    // Predicated region
    $region2: #{net_forward.1} parent=1 // pred_check
      _
    $region3: #{net_forward.1} parent=1 // pred_check_branch
      %10 = sbr.rel (0) target = $region5
    $region4: #{net_forward.1} parent=1 // pred_region
      _
    $region5: #{net_forward.1} parent=1 // pred_fallthru
      _
    // Predicated region
    $region6: #{net_forward.1} parent=1 // pred_check
      _
    $region7: #{net_forward.1} parent=1 // pred_check_branch
      %12 = sbr.rel (0) target = $region9
    $region8: #{net_forward.1} parent=1 // pred_region
      %s14 = ssub.s32 384, 384
      %15 = vsyncadd [#allocation3], %s14
      %s16 = sshll.u32 [#allocation2], 4
      %s17 = int_to_ptr.vmem [resolvable:$true] %s16
      %22 = dma.hbm_to_vmem [thread:$0]  %s1, 384, %s17, [#allocation3], 128, 128, 8
    $region9: #{net_forward.1} parent=1 // pred_fallthru
      _
    // Predicated region
    $region10: #{net_forward.1} parent=1 // pred_check
      _
    $region11: #{net_forward.1} parent=1 // pred_check_branch
      %24 = sbr.rel (0) target = $region13
    $region12: #{net_forward.1} parent=1 // pred_region
      %25 = dma.done [#allocation3], 384
    $region13: #{net_forward.1} parent=1 // pred_fallthru
      _
    %v26 = vld [vmem:[%s0] sm:$0x3]
    %v27 = vld [vmem:[#allocation2] sm:$0xff]
    %v28 = vld [vmem:[#allocation2 + $0x8] sm:$0xff]
    %v29 = vld [vmem:[#allocation2 + $0x10] sm:$0xf]
    %31 = vset.pattern.permute.xlu0 20
    %32 = vperm.xlu0 %31, %v27
    %v33 = vpop.permute.xlu0 %32
    %36 = vset.pattern.permute.xlu0 20
    %37 = vperm.xlu0 %36, %v28
    %v38 = vpop.permute.xlu0 %37
    %41 = vset.pattern.permute.xlu0 20
    %42 = vperm.xlu0 %41, %v29
    %v43 = vpop.permute.xlu0 %42
    %v46 = vlaneseq
    %v47 = vshrl.u32 %v46, 7
    %v48 = vsub.s32 0, %v47
    %v49 = vrot.slane %v26, %v48
    %v50 = vlaneseq
    %v51 = vshrl.u32 %v50, 7
    %v52 = vsub.s32 1, %v51
    %v53 = vrot.slane %v26, %v52
    %v56 = vmul.f32 %v33, %v49
    %v57 = vmul.f32 %v33, %v53
    %v58 = vmul.f32 %v38, %v49
    %v59 = vmul.f32 %v38, %v53
    %v60 = vmul.f32 %v43, %v49
    %v61 = vmul.f32 %v43, %v53
    %62 = vset.pattern.permute.xlu0 21
    %63 = vperm.xlu0 %62, %v27
    %v64 = vpop.permute.xlu0 %63
    %66 = vset.pattern.permute.xlu0 21
    %67 = vperm.xlu0 %66, %v28
    %v68 = vpop.permute.xlu0 %67
    %70 = vset.pattern.permute.xlu0 21
    %71 = vperm.xlu0 %70, %v29
    %v72 = vpop.permute.xlu0 %71
    %v74 = vadd.f32 %v56, %v64
    %v75 = vadd.f32 %v57, %v64
    %v76 = vadd.f32 %v58, %v68
    %v77 = vadd.f32 %v59, %v68
    %v78 = vadd.f32 %v60, %v72
    %v79 = vadd.f32 %v61, %v72
    %v80 = vmax.f32 %v74, 0.0
    %v81 = vmax.f32 %v75, 0.0
    %v82 = vmax.f32 %v76, 0.0
    %v83 = vmax.f32 %v77, 0.0
    %v84 = vmax.f32 %v78, 0.0
    %v85 = vmax.f32 %v79, 0.0
    %86 = vset.pattern.permute.xlu0 22
    %87 = vperm.xlu0 %86, %v27
    %v88 = vpop.permute.xlu0 %87
    %90 = vset.pattern.permute.xlu0 22
    %91 = vperm.xlu0 %90, %v28
    %v92 = vpop.permute.xlu0 %91
    %94 = vset.pattern.permute.xlu0 22
    %95 = vperm.xlu0 %94, %v29
    %v96 = vpop.permute.xlu0 %95
    %vm98 = vcmask 162816
    %v99 = vsel %vm98, %v27, 0
    %v101 = vsel %vm98, %v28, 0
    %v103 = vsel %vm98, %v29, 0
    %vm105 = vcmask 1043456
    %v107 = vsel %vm105, %v84, 0
    %v110 = vsel %vm105, %v85, 0
    %112 = vmatprep.subr.mxu0 %v81
    %113 = vmatpush1.msra.mxu0 %v80
    %114 = vmatprep.subr.mxu0 %v83
    %115 = vmatpush1.msra.mxu0 %v82
    %116 = vmatprep.subr.mxu0 %v110
    %117 = vmatpush1.msra.mxu0 %v107
    %118 = vmatprep.subr.mxu0 0.0
    %119 = vmatpush1.msra.mxu0 0.0
    %120 = vmatprep.subr.mxu0 0.0
    %121 = vmatpush1.msra.mxu0 0.0
    %122 = vmatprep.subr.mxu0 0.0
    %123 = vmatpush1.msra.mxu0 0.0
    %124 = vmatprep.subr.mxu0 0.0
    %125 = vmatpush1.msra.mxu0 0.0
    %126 = vmatprep.subr.mxu0 0.0
    %127 = vmatpush1.msra.mxu0 0.0
    %128 = vmatprep.subr.mxu0 0.0
    %129 = vmatpush1.msra.mxu0 0.0
    %130 = vmatprep.subr.mxu0 0.0
    %131 = vmatpush1.msra.mxu0 0.0
    %132 = vmatprep.subr.mxu0 0.0
    %133 = vmatpush1.msra.mxu0 0.0
    %134 = vmatprep.subr.mxu0 0.0
    %135 = vmatpush1.msra.mxu0 0.0
    %136 = vmatprep.subr.mxu0 0.0
    %137 = vmatpush1.msra.mxu0 0.0
    %138 = vmatprep.subr.mxu0 0.0
    %139 = vmatpush1.msra.mxu0 0.0
    %140 = vmatprep.subr.mxu0 0.0
    %141 = vmatpush1.msra.mxu0 0.0
    %142 = vmatprep.subr.mxu0 0.0
    %143 = vmatpush1.msra.mxu0 0.0
    %144 = vmatprep.subr.mxu0 0.0
    %145 = vmatpush1.msra.mxu0 0.0
    %146 = vmatprep.subr.mxu0 0.0
    %147 = vmatpush1.msra.mxu0 0.0
    %148 = vmatprep.subr.mxu0 0.0
    %149 = vmatpush1.msra.mxu0 0.0
    %150 = vmatprep.subr.mxu0 0.0
    %151 = vmatpush1.msra.mxu0 0.0
    %152 = vmatprep.subr.mxu0 0.0
    %153 = vmatpush1.msra.mxu0 0.0
    %154 = vmatprep.subr.mxu0 0.0
    %155 = vmatpush1.msra.mxu0 0.0
    %156 = vmatprep.subr.mxu0 0.0
    %157 = vmatpush1.msra.mxu0 0.0
    %158 = vmatprep.subr.mxu0 0.0
    %159 = vmatpush1.msra.mxu0 0.0
    %160 = vmatprep.subr.mxu0 0.0
    %161 = vmatpush1.msra.mxu0 0.0
    %162 = vmatprep.subr.mxu0 0.0
    %163 = vmatpush1.msra.mxu0 0.0
    %164 = vmatprep.subr.mxu0 0.0
    %165 = vmatpush1.msra.mxu0 0.0
    %166 = vmatprep.subr.mxu0 0.0
    %167 = vmatpush1.msra.mxu0 0.0
    %168 = vmatprep.subr.mxu0 0.0
    %169 = vmatpush1.msra.mxu0 0.0
    %170 = vmatprep.subr.mxu0 0.0
    %171 = vmatpush1.msra.mxu0 0.0
    %172 = vmatprep.subr.mxu0 0.0
    %173 = vmatpush1.msra.mxu0 0.0
    %174 = vmatprep.subr.mxu0 0.0
    %175 = vmatpush1.msra.mxu0 0.0
    %176 = vmatprep.mubr.f32.mxu0 0.0
    %177 = vmatmul.mubr.f32.gmra.mrb[0].mxu0 %v99
    %v178 = vpop.f32.mrb[0].mxu0
    %v179 = vadd.f32 %v88, %v178
    %v180 = vpop.f32.mrb[0].mxu0
    %v181 = vadd.f32 %v88, %v180
    %182 = vmatprep.mubr.f32.mxu0 0.0
    %183 = vmatmul.mubr.f32.gmra.mrb[0].mxu0 %v101
    %v184 = vpop.f32.mrb[0].mxu0
    %v185 = vadd.f32 %v92, %v184
    %v186 = vpop.f32.mrb[0].mxu0
    %v187 = vadd.f32 %v92, %v186
    %188 = vmatprep.mubr.f32.mxu0 0.0
    %189 = vmatmul.mubr.f32.gmra.mrb[0].mxu0 %v103
    %v190 = vpop.f32.mrb[0].mxu0
    %v191 = vadd.f32 %v96, %v190
    %v192 = vpop.f32.mrb[0].mxu0
    %v193 = vadd.f32 %v96, %v192
    %194 = vdwg.mxu0
    %v195 = vmax.f32 %v179, 0.0
    %v196 = vmax.f32 %v181, 0.0
    %v197 = vmax.f32 %v185, 0.0
    %v198 = vmax.f32 %v187, 0.0
    %v199 = vmax.f32 %v191, 0.0
    %v200 = vmax.f32 %v193, 0.0
    %201 = vset.pattern.permute.xlu0 23
    %202 = vperm.xlu0 %201, %v27
    %v203 = vpop.permute.xlu0 %202
    %205 = vset.pattern.permute.xlu0 23
    %206 = vperm.xlu0 %205, %v28
    %v207 = vpop.permute.xlu0 %206
    %209 = vset.pattern.permute.xlu0 23
    %210 = vperm.xlu0 %209, %v29
    %v211 = vpop.permute.xlu0 %210
    %v213 = vmul.f32 %v203, %v195
    %v214 = vmul.f32 %v203, %v196
    %v215 = vmul.f32 %v207, %v197
    %v216 = vmul.f32 %v207, %v198
    %v217 = vmul.f32 %v211, %v199
    %v218 = vmul.f32 %v211, %v200
    %v219 = vadd.f32 %v213, %v215
    %v220 = vsel %vm105, %v217, 0.0
    %v221 = vadd.f32 %v219, %v220
    %v222 = vrot.slane %v221, 4
    %v223 = vadd.f32 %v221, %v222
    %v224 = vrot.slane %v223, 2
    %v225 = vadd.f32 %v223, %v224
    %v226 = vrot.slane %v225, 1
    %v227 = vadd.f32 %v225, %v226
    %vm228 = vcmask 588800
    %v229 = vsel %vm228, %v214, 0.0
    %v230 = vsel %vm228, %v216, 0.0
    %v231 = vadd.f32 %v229, %v230
    %vm232 = vcmask 584704
    %v233 = vsel %vm232, %v218, 0.0
    %v234 = vadd.f32 %v231, %v233
    %v235 = vrot.slane %v234, 4
    %v236 = vadd.f32 %v234, %v235
    %v237 = vrot.slane %v236, 2
    %v238 = vadd.f32 %v236, %v237
    %v239 = vrot.slane %v238, 1
    %v240 = vadd.f32 %v238, %v239
    %241 = vset.pattern.permute.xlu0 24
    %242 = vperm.xlu0 %241, %v27
    %v243 = vpop.permute.xlu0 %242
    %v245 = vadd.f32 %v227, %v243
    %v246 = vadd.f32 %v240, %v243
    %v249 = vcombine.low %v245, %v246
    %v251 = vunpack.c.l.s4 1966171168
    %v252 = vunpack.c.0.s8 %v251
    %v253 = vlaneseq
    %v254 = vshrl.u32 %v253, 7
    %v255 = vsub.s32 %v252, %v254
    %v256 = vrot.slane %v249, %v255
    %v258 = vunpack.c.l.s4 1966171168
    %v259 = vunpack.c.0.s8 %v258
    %v260 = vlaneseq
    %v261 = vshrl.u32 %v260, 7
    %v262 = vsub.s32 %v259, %v261
    %v263 = vrot.slane %v256, %v262
    %v265 = vlaneseq
    %vm266 = vcmp.ge.s32.totalorder %v265, 0
    %vm267 = vcmp.lt.s32.totalorder %v265, 200
    %vm268 = vmand %vm266, %vm267
    %269 = vst.msk [vmem:[#allocation5] sm:$0x3] %vm268, %v263
    // Predicated region
    $region14: #{net_forward.1} parent=1 // pred_check
      _
    $region15: #{net_forward.1} parent=1 // pred_check_branch
      %271 = sbr.rel (0) target = $region17
    $region16: #{net_forward.1} parent=1 // pred_region
      %s273 = ssub.s32 32, 32
      %274 = vsyncadd [#allocation4], %s273
      %s276 = sshll.u32 [#allocation5], 4
      %s277 = int_to_ptr.vmem [resolvable:$true] %s276
      %279 = dma.vmem_to_hbm [thread:$0]  %s277, 32, %s2, [#allocation4]
    $region17: #{net_forward.1} parent=1 // pred_fallthru
      _
    // Predicated region
    $region18: #{net_forward.1} parent=1 // pred_check
      _
    $region19: #{net_forward.1} parent=1 // pred_check_branch
      %281 = sbr.rel (0) target = $region21
    $region20: #{net_forward.1} parent=1 // pred_region
      %282 = dma.done [#allocation4], 32
    $region21: #{net_forward.1} parent=1 // pred_fallthru
      _
    %283 = vsyncpa [#allocation3], 1
    %284 = vsyncpa [#allocation4], 1

</llo_original>
